<compile_context>
chip_gen: v7x
topology: tpu7x:2x2x1
jax: 0.10.0
libtpu: 0.0.40
codegen_flags: <defaults>
</compile_context>

<pallas_src>
import functools
import math

import jax
import jax.numpy as jnp
from jax.experimental import pallas as pl
from jax.experimental.pallas import tpu as pltpu


def eca_kernel_size(channels, gamma=2, b=1):
    """Same formula as the PyTorch module."""
    k = int(abs((math.log(channels, 2) + b) / gamma))
    return k if k % 2 else k + 1


def _conv_band_matrix(w, C):
    """Exact reformulation of conv1d(1->1, k taps, pad=(k-1)//2, no bias) over the
    channel axis as a (C_out, C_in) band matrix:  out = Wmat @ mean_col."""
    w = w.reshape(-1).astype(jnp.float32)          # accept (k,) or (1, 1, k)
    k = int(w.shape[0])
    pad = (k - 1) // 2
    o = jnp.arange(C)[:, None]                      # output channel index
    i = jnp.arange(C)[None, :]                      # input  channel index
    tap = i - o + pad                               # which conv tap hits (o, i)
    valid = (tap >= 0) & (tap < k)
    return jnp.where(valid, w[jnp.clip(tap, 0, k - 1)], 0.0)   # (C, C) f32


def _pick_tile_s(S, C, itemsize, target_bytes, max_tile=16384):
    """Largest lane-dense spatial tile with one x block <= target_bytes.
    Multiple of 128 unless it covers the full spatial extent."""
    per_col = max(C, 8) * itemsize                 # bytes per spatial column (sublane-padded-ish)
    ts = min(target_bytes // per_col, max_tile)
    ts = max((ts // 128) * 128, 128)
    return S if ts >= S else ts


def _eca_kernel(x_ref, w_ref, o_ref, acc_ref, *, spatial, tile_s):
    # x_ref: (1, C, tile_s) block of the NCHW-native (N, C, H*W) input.
    # w_ref: (C, C) band matrix (conv1d over channels).  o_ref: (1, C, 1).
    s = pl.program_id(1)
    last = pl.num_programs(1) - 1

    @pl.when(s == 0)
    def _():
        acc_ref[...] = jnp.zeros_like(acc_ref)

    ragged = (spatial % tile_s) != 0               # trace-time constant

    if ragged:
        # Full interior tiles: plain sum (no mask VALU work).
        @pl.when(s < last)
        def _():
            xf = x_ref[...].astype(jnp.float32)
            acc_ref[...] += jnp.sum(xf, axis=2, keepdims=True)

        # Last (partial) tile: mask the out-of-range lanes (edge block holds garbage).
        @pl.when(s == last)
        def _():
            xf = x_ref[...].astype(jnp.float32)
            lane = jax.lax.broadcasted_iota(jnp.int32, xf.shape, 2)
            xf = jnp.where(s * tile_s + lane < spatial, xf, 0.0)
            acc_ref[...] += jnp.sum(xf, axis=2, keepdims=True)
    else:
        xf = x_ref[...].astype(jnp.float32)
        acc_ref[...] += jnp.sum(xf, axis=2, keepdims=True)

    # Finalize: mean -> channel conv (band-matrix matmul) -> sigmoid.
    @pl.when(s == last)
    def _():
        C = acc_ref.shape[1]
        mean = acc_ref[...].reshape(C, 1) * (1.0 / float(spatial))           # (C, 1) f32
        v = jnp.dot(w_ref[...], mean, preferred_element_type=jnp.float32)    # (C, 1)
        o_ref[...] = jax.nn.sigmoid(v).reshape(1, C, 1).astype(o_ref.dtype)


def efficient_channel_attention_pallas(x, conv_weight, *, target_tile_bytes=2 << 20):
    """x: (N, C, H, W).  conv_weight: Conv1d weight, shape (k,) or (1, 1, k).
    Returns the ECA attention vector, shape (N, C, 1, 1), dtype of x."""
    N, C, H, W = x.shape
    S = H * W

    x3 = x.reshape(N, C, S)                     # NCHW-native; no transpose / HBM pass
    wmat = _conv_band_matrix(conv_weight, C)    # (C, C) f32, trace-time glue

    itemsize = jnp.dtype(x.dtype).itemsize
    ts = _pick_tile_s(S, C, itemsize, target_tile_bytes)
    grid = (N, pl.cdiv(S, ts))

    kern = functools.partial(_eca_kernel, spatial=S, tile_s=ts)

    cost = pl.CostEstimate(
        flops=2 * N * C * (S + C),
        transcendentals=N * C,
        bytes_accessed=int(x3.size) * itemsize + C * C * 4 + N * C * itemsize,
    )

    out = pl.pallas_call(
        kern,
        out_shape=jax.ShapeDtypeStruct((N, C, 1), x.dtype),
        grid_spec=pltpu.PrefetchScalarGridSpec(
            num_scalar_prefetch=0,
            grid=grid,
            in_specs=[
                pl.BlockSpec((1, C, ts), lambda n, s: (n, 0, s)),   # x tile (chan=sublane, spatial=lane)
                pl.BlockSpec((C, C), lambda n, s: (0, 0)),          # band matrix (VMEM-resident)
            ],
            out_specs=pl.BlockSpec((1, C, 1), lambda n, s: (n, 0, 0)),
            scratch_shapes=[pltpu.VMEM((1, C, 1), jnp.float32)],    # f32 spatial-sum accumulator
        ),
        compiler_params=pltpu.CompilerParams(
            dimension_semantics=("parallel", "arbitrary")),
        cost_estimate=cost,
    )(x3, wmat)

    return out.reshape(N, C, 1, 1)


def _reference(x, conv_weight):
    """Plain-JAX replica of the PyTorch forward (for verification)."""
    N, C, H, W = x.shape
    w = conv_weight.reshape(-1).astype(jnp.float32)
    k = int(w.shape[0])
    pad = (k - 1) // 2
    v = jnp.mean(x.astype(jnp.float32), axis=(2, 3))        # (N, C)  == AdaptiveAvgPool2d(1)
    vp = jnp.pad(v, ((0, 0), (pad, pad)))
    out = jnp.zeros_like(v)
    for j in range(k):                                       # conv1d over the channel axis
        out = out + w[j] * vp[:, j:j + C]
    return jax.nn.sigmoid(out).reshape(N, C, 1, 1).astype(x.dtype)


if __name__ == "__main__":
    key = jax.random.PRNGKey(0)

    # Config 1: channels=16 -> kernel_size=3 (exercises the channel conv), single spatial tile.
    N, C, H, W = 2, 16, 16, 16
    k = eca_kernel_size(C)                       # 3
    kx, kw, key = jax.random.split(key, 3)
    x = jax.random.normal(kx, (N, C, H, W), jnp.float32)
    w = jax.random.normal(kw, (1, 1, k), jnp.float32) * 0.5  # PyTorch Conv1d weight shape

    out = jax.block_until_ready(efficient_channel_attention_pallas(x, w))
    ref = jax.block_until_ready(_reference(x, w))
    assert out.shape == (N, C, 1, 1)
    assert jnp.allclose(out, ref, atol=1e-5, rtol=1e-5), float(jnp.max(jnp.abs(out - ref)))

    # Config 2: channels=4 -> kernel_size=1, odd spatial size (full-extent spatial tile).
    N2, C2, H2, W2 = 1, 4, 13, 11
    k2 = eca_kernel_size(C2)                     # 1
    kx2, kw2, key = jax.random.split(key, 3)
    x2 = jax.random.normal(kx2, (N2, C2, H2, W2), jnp.float32)
    w2 = jax.random.normal(kw2, (1, 1, k2), jnp.float32) * 0.5

    out2 = jax.block_until_ready(efficient_channel_attention_pallas(x2, w2))
    ref2 = jax.block_until_ready(_reference(x2, w2))
    assert out2.shape == (N2, C2, 1, 1)
    assert jnp.allclose(out2, ref2, atol=1e-5, rtol=1e-5), float(jnp.max(jnp.abs(out2 - ref2)))

    # Config 3: multi-tile spatial grid with a ragged last tile (masked partial edge block).
    N3, C3, H3, W3 = 1, 8, 24, 24                # S = 576; force ts = 256 -> 3 steps, 64 valid on last
    k3 = eca_kernel_size(C3)                     # 3
    kx3, kw3 = jax.random.split(key)
    x3_ = jax.random.normal(kx3, (N3, C3, H3, W3), jnp.float32)
    w3_ = jax.random.normal(kw3, (1, 1, k3), jnp.float32) * 0.5

    out3 = jax.block_until_ready(
        efficient_channel_attention_pallas(x3_, w3_, target_tile_bytes=8 * 1024))
    ref3 = jax.block_until_ready(_reference(x3_, w3_))
    assert out3.shape == (N3, C3, 1, 1)
    assert jnp.allclose(out3, ref3, atol=1e-5, rtol=1e-5), float(jnp.max(jnp.abs(out3 - ref3)))

    print("KERNEL_OK")
</pallas_src>

<mosaic_0001>
module attributes {stable_mosaic.version = 11 : i64} {
  func.func @_eca_kernel(%arg0: i32, %arg1: i32, %arg2: memref<1x16x256xf32, #tpu.memory_space<vmem>>, %arg3: memref<16x16xf32, #tpu.memory_space<vmem>>, %arg4: memref<1x16x1xf32, #tpu.memory_space<vmem>>, %arg5: memref<1x16x1xf32, #tpu.memory_space<vmem>>) attributes {dimension_semantics = [#tpu.dimension_semantics<parallel>, #tpu.dimension_semantics<arbitrary>], iteration_bounds = array<i64: 2, 1>, scalar_prefetch = 0 : i64, scratch_operands = 1 : i64, tpu.core_type = #tpu.core_type<tc>, window_params = [{transform_indices = @transform_0, window_bounds = array<i64: 1, 16, 256>}, {pipeline_mode = #tpu.pipeline_mode<synchronous>, transform_indices = @transform_1, window_bounds = array<i64: 16, 16>}, {transform_indices = @transform_2, window_bounds = array<i64: 1, 16, 1>}]} {
    %c0_i32 = arith.constant 0 : i32
    %0 = arith.cmpi eq, %arg1, %c0_i32 : i32
    %1 = arith.extui %0 : i1 to i32
    %c0_i32_0 = arith.constant 0 : i32
    %2 = arith.cmpi ne, %1, %c0_i32_0 : i32
    scf.if %2 {
      %cst_11 = arith.constant 0.000000e+00 : f32
      %12 = vector.broadcast %cst_11 : f32 to vector<1x16x1xf32>
      %c0_12 = arith.constant 0 : index
      %c0_13 = arith.constant 0 : index
      %c0_14 = arith.constant 0 : index
      %13 = vector.load %arg5[%c0_12, %c0_13, %c0_14] : memref<1x16x1xf32, #tpu.memory_space<vmem>>, vector<1x16x1xf32>
      tpu.vector_store %arg5[%c0_12, %c0_13, %c0_14], %12 {strides = array<i32>} : memref<1x16x1xf32, #tpu.memory_space<vmem>>, vector<1x16x1xf32>,
    } else {
    }
    %c0 = arith.constant 0 : index
    %c0_1 = arith.constant 0 : index
    %c0_2 = arith.constant 0 : index
    %3 = vector.load %arg2[%c0, %c0_1, %c0_2] : memref<1x16x256xf32, #tpu.memory_space<vmem>>, vector<1x16x256xf32>
    %c0_3 = arith.constant 0 : index
    %c0_4 = arith.constant 0 : index
    %c0_5 = arith.constant 0 : index
    %4 = vector.load %arg5[%c0_3, %c0_4, %c0_5] : memref<1x16x1xf32, #tpu.memory_space<vmem>>, vector<1x16x1xf32>
    %cst = arith.constant dense<0.000000e+00> : vector<1x16xf32>
    %5 = vector.multi_reduction <add>, %3, %cst [2] : vector<1x16x256xf32> to vector<1x16xf32>
    %6 = vector.shape_cast %5 : vector<1x16xf32> to vector<1x16x1xf32>
    %7 = arith.addf %4, %6 : vector<1x16x1xf32>
    %c0_6 = arith.constant 0 : index
    %c0_7 = arith.constant 0 : index
    %c0_8 = arith.constant 0 : index
    %8 = vector.load %arg5[%c0_6, %c0_7, %c0_8] : memref<1x16x1xf32, #tpu.memory_space<vmem>>, vector<1x16x1xf32>
    tpu.vector_store %arg5[%c0_6, %c0_7, %c0_8], %7 {strides = array<i32>} : memref<1x16x1xf32, #tpu.memory_space<vmem>>, vector<1x16x1xf32>,
    %c0_i32_9 = arith.constant 0 : i32
    %9 = arith.cmpi eq, %arg1, %c0_i32_9 : i32
    %10 = arith.extui %9 : i1 to i32
    %c0_i32_10 = arith.constant 0 : i32
    %11 = arith.cmpi ne, %10, %c0_i32_10 : i32
    scf.if %11 {
      %c0_11 = arith.constant 0 : index
      %c0_12 = arith.constant 0 : index
      %c0_13 = arith.constant 0 : index
      %12 = vector.load %arg5[%c0_11, %c0_12, %c0_13] : memref<1x16x1xf32, #tpu.memory_space<vmem>>, vector<1x16x1xf32>
      %13 = vector.shape_cast %12 : vector<1x16x1xf32> to vector<16x1xf32>
      %cst_14 = arith.constant 3.906250e-03 : f32
      %14 = vector.broadcast %cst_14 : f32 to vector<16x1xf32>
      %15 = arith.mulf %13, %14 : vector<16x1xf32>
      %c0_15 = arith.constant 0 : index
      %c0_16 = arith.constant 0 : index
      %16 = vector.load %arg3[%c0_15, %c0_16] : memref<16x16xf32, #tpu.memory_space<vmem>>, vector<16x16xf32>
      %cst_17 = arith.constant dense<0.000000e+00> : vector<16x1xf32>
      %17 = tpu.matmul %16, %15, %cst_17 {dimension_numbers = #tpu.dot_dimension_numbers<[1], [0], [0], [1], [0, 0, 1, 1], [], []>} : vector<16x16xf32>, vector<16x1xf32>, vector<16x1xf32> -> vector<16x1xf32>
      %18 = arith.negf %17 : vector<16x1xf32>
      %19 = math.exp %18 : vector<16x1xf32>
      %cst_18 = arith.constant 1.000000e+00 : f32
      %20 = vector.broadcast %cst_18 : f32 to vector<16x1xf32>
      %21 = arith.addf %20, %19 : vector<16x1xf32>
      %22 = arith.divf %20, %21 : vector<16x1xf32>
      %23 = vector.shape_cast %22 : vector<16x1xf32> to vector<1x16x1xf32>
      %c0_19 = arith.constant 0 : index
      %c0_20 = arith.constant 0 : index
      %c0_21 = arith.constant 0 : index
      %24 = vector.load %arg4[%c0_19, %c0_20, %c0_21] : memref<1x16x1xf32, #tpu.memory_space<vmem>>, vector<1x16x1xf32>
      tpu.vector_store %arg4[%c0_19, %c0_20, %c0_21], %23 {strides = array<i32>} : memref<1x16x1xf32, #tpu.memory_space<vmem>>, vector<1x16x1xf32>,
    } else {
    }
    return
  }
  func.func @transform_0(%arg0: i32, %arg1: i32) -> (i32, i32, i32) {
    %c0_i32 = arith.constant 0 : i32
    %c0_i32_0 = arith.constant 0 : i32
    return %arg0, %c0_i32, %arg1 : i32, i32, i32
  }
  func.func @transform_1(%arg0: i32, %arg1: i32) -> (i32, i32) {
    %c0_i32 = arith.constant 0 : i32
    %c0_i32_0 = arith.constant 0 : i32
    %c0_i32_1 = arith.constant 0 : i32
    return %c0_i32, %c0_i32_0 : i32, i32
  }
  func.func @transform_2(%arg0: i32, %arg1: i32) -> (i32, i32, i32) {
    %c0_i32 = arith.constant 0 : i32
    %c0_i32_0 = arith.constant 0 : i32
    %c0_i32_1 = arith.constant 0 : i32
    return %arg0, %c0_i32, %c0_i32_0 : i32, i32, i32
  }
}

</mosaic_0001>

<llo_original>
// kernel: tpu_custom_call.1
$region0: #{tpu_custom_call.1}
  #allocation0 [shape = 'u32[]', space=smem, size = 0x4, offset = 0x4, fixed_abs, tag = 'smem constant byte address 0x4 - core index']
  #allocation1 [shape = 'u32[144,128]{1,0:T(1,128)}', space=vmem, size = 0x12000, scoped, tag = 'internal scratch']
  #allocation2 [shape = 'f32[1,16,1]{2,1,0:T(8,128)}', space=vmem, size = 0x2000, scoped, tag = 'scratch operand']
  %s0 = inlined_call_operand.hbm [shape: f32[2,16,256], index: 0, kind: input, shape index: {}]
  %s1 = inlined_call_operand.hbm [shape: f32[16,16], index: 1, kind: input, shape index: {}]
  %s2 = inlined_call_operand.vmem [shape: f32[2,16,1], index: 2, kind: output, shape index: {}]
  %s3 = sld [smem:[#allocation0]]
  $region57: #{tpu_custom_call.1} parent=0
    _
  %s5 = ssub.s32 1, %s3
  %s6 = scalar_select 0, %s5, %s3
  $region1: #{tpu_custom_call.1} parent=0
    #allocation3 [shape = 'u8[32768]{0}', space=vmem, size = 0x8000, scoped, tag = 'input window, operand 0']
    #allocation4 [shape = 's32[2]{0}', space=sflag, size = 0x8, scoped, tag = 'scoped memory for tpu_custom_call.1']
    #allocation5 [shape = 'u8[8192]{0}', space=vmem, size = 0x2000, scoped, tag = 'input window, operand 1, single buffered']
    #allocation6 [shape = 's32[1]{0}', space=sflag, size = 0x4, scoped, tag = 'scoped memory for tpu_custom_call.1']
    %7 = vsyncpa [#allocation4], 0
    %s8 = scalar_lea.sflag [#allocation4], 1
    %9 = vsyncpa %s8, 0
    %10 = vsyncpa [#allocation6], 0
    loop: start=0, step=1, limit=4
    $region2: #{tpu_custom_call.1} parent=1 // loop_pre_header
      _
    $region3: #{tpu_custom_call.1} parent=1 // loop_header
      %s12 = sphi 0, %s16
      %p13 = scmp.ge.s32.totalorder %s12, 4
      %s19 = sphi 0, %s31
      %s20 = sphi 0, %s27
      %s21 = sphi 0, %s19
      %s22 = sphi 0, %s20
      %s23 = sphi 0, %s21
      %s24 = sphi 0, %s22
      %s36 = sphi 0, %s38
      %s39 = sphi 0, %s36
      %s40 = sphi 0, %s39
      %s56 = sphi 0, %s40
      %s60 = sphi 0, %s60
      %s62 = sphi 0, %s60
      %s63 = sphi 0, %s62
      %s77 = sphi 0, %s63
      %s83 = sphi 0, %s85
      %s86 = sphi 0, %s83
      %s87 = sphi 0, %s86
      %s103 = sphi 0, %s87
    $region4: #{tpu_custom_call.1} parent=1 // loop_header_branch
      %15 = sbr.rel (%p13) target = $region8
    $region5: #{tpu_custom_call.1} parent=1 // loop_body
      %s17 = ssub.s32 %s12, 1
      %s18 = ssub.s32 %s12, 2
      %s25 = sadd.s32 1, %s20
      %p26 = scmp.ge.s32.totalorder %s25, 1
      %s27 = scalar_select %p26, 0, %s25
      %s28 = sadd.s32 1, %s19
      %s29 = scalar_select %p26, %s28, %s19
      %p30 = scmp.ge.s32.totalorder %s29, 2
      %s31 = scalar_select %p30, 0, %s29
      %s32 = ssub.s32 %s19, %s31
      %s33 = ssub.s32 %s20, %s27
      %s34 = sor.u32 %s32, %s33
      %p35 = scmp.eq.s32.totalorder %s34, 0
      %s37 = sadd.s32 %s36, 1
      %s38 = scalar_select %p35, %s36, %s37
      %p41 = pneg %p35
      %p42 = scmp.eq.s32.totalorder %s12, 1
      %p43 = por %p41, %p42
      %p44 = scmp.ne.s32.totalorder %s36, %s39
      %p45 = scmp.eq.s32.totalorder %s12, 0
      %p46 = por %p44, %p45
      %p47 = scmp.ne.s32.totalorder %s36, %s39
      %p48 = scmp.eq.s32.totalorder %s17, 1
      %p49 = por %p47, %p48
      %p50 = scmp.ne.s32.totalorder %s39, %s40
      %p51 = scmp.eq.s32.totalorder %s17, 0
      %p52 = por %p50, %p51
      %p53 = scmp.ne.s32.totalorder %s39, %s40
      %p54 = scmp.eq.s32.totalorder %s18, 1
      %p55 = por %p53, %p54
      %p57 = scmp.ne.s32.totalorder %s40, %s56
      %p58 = scmp.eq.s32.totalorder %s18, 0
      %p59 = por %p57, %p58
      %s61 = sadd.s32 %s60, 1
      %p64 = scmp.eq.s32.totalorder %s12, 1
      %p65 = scmp.ne.s32.totalorder %s60, %s62
      %p66 = scmp.eq.s32.totalorder %s12, 0
      %p67 = por %p65, %p66
      %p68 = scmp.ne.s32.totalorder %s60, %s62
      %p69 = scmp.eq.s32.totalorder %s17, 1
      %p70 = por %p68, %p69
      %p71 = scmp.ne.s32.totalorder %s62, %s63
      %p72 = scmp.eq.s32.totalorder %s17, 0
      %p73 = por %p71, %p72
      %p74 = scmp.ne.s32.totalorder %s62, %s63
      %p75 = scmp.eq.s32.totalorder %s18, 1
      %p76 = por %p74, %p75
      %p78 = scmp.ne.s32.totalorder %s63, %s77
      %p79 = scmp.eq.s32.totalorder %s18, 0
      %p80 = por %p78, %p79
      %s81 = ssub.s32 %s19, %s31
      %p82 = scmp.eq.s32.totalorder %s81, 0
      %s84 = sadd.s32 %s83, 1
      %s85 = scalar_select %p82, %s83, %s84
      %p88 = pneg %p82
      %p89 = scmp.eq.s32.totalorder %s12, 1
      %p90 = por %p88, %p89
      %p91 = scmp.ne.s32.totalorder %s83, %s86
      %p92 = scmp.eq.s32.totalorder %s12, 0
      %p93 = por %p91, %p92
      %p94 = scmp.ne.s32.totalorder %s83, %s86
      %p95 = scmp.eq.s32.totalorder %s17, 1
      %p96 = por %p94, %p95
      %p97 = scmp.ne.s32.totalorder %s86, %s87
      %p98 = scmp.eq.s32.totalorder %s17, 0
      %p99 = por %p97, %p98
      %p100 = scmp.ne.s32.totalorder %s86, %s87
      %p101 = scmp.eq.s32.totalorder %s18, 1
      %p102 = por %p100, %p101
      %p104 = scmp.ne.s32.totalorder %s87, %s103
      %p105 = scmp.eq.s32.totalorder %s18, 0
      %p106 = por %p104, %p105
      %p107 = scmp.le.s32.totalorder 1, %s12
      %p108 = scmp.lt.s32.totalorder %s12, 3
      %p109 = pnand %p107, %p108
      %p110 = pneg %p109
      // Predicated region
      $region9: #{tpu_custom_call.1} parent=5 // pred_check
        _
      $region10: #{tpu_custom_call.1} parent=5 // pred_check_branch
        %112 = sbr.rel (%p109) target = $region12
      $region11: #{tpu_custom_call.1} parent=5 // pred_region
        %s113 = ssub.s32 %s12, 1
        // Predicated region
        $region13: #{tpu_custom_call.1} parent=11 // pred_check
          %p114 = pneg %p73
        $region14: #{tpu_custom_call.1} parent=11 // pred_check_branch
          %116 = sbr.rel (%p114) target = $region16
        $region15: #{tpu_custom_call.1} parent=11 // pred_region
          %s118 = ssub.s32 256, 256
          %119 = vsyncadd [#allocation6], %s118
          %s120 = sshll.u32 [#allocation5], 4
          %s121 = int_to_ptr.vmem [resolvable:$true] %s120
          %126 = dma.hbm_to_vmem [thread:$0]  %s1, 256, %s121, [#allocation6], 128, 128, 8
        $region16: #{tpu_custom_call.1} parent=11 // pred_fallthru
          _
      $region12: #{tpu_custom_call.1} parent=5 // pred_fallthru
        _
      %p127 = scmp.lt.s32.totalorder %s12, 2
      // Predicated region
      $region17: #{tpu_custom_call.1} parent=5 // pred_check
        %p128 = pneg %p127
      $region18: #{tpu_custom_call.1} parent=5 // pred_check_branch
        %130 = sbr.rel (%p128) target = $region20
      $region19: #{tpu_custom_call.1} parent=5 // pred_region
        // Predicated region
        $region21: #{tpu_custom_call.1} parent=19 // pred_check
          %p131 = pneg %p46
        $region22: #{tpu_custom_call.1} parent=19 // pred_check_branch
          %133 = sbr.rel (%p131) target = $region24
        $region23: #{tpu_custom_call.1} parent=19 // pred_region
          %s134 = sand.u32 %s36, 1
          %s135 = scalar_lea.sflag [#allocation4], %s134
          %s136 = sand.u32 %s36, 1
          %s137 = smul.addr %s136, 32
          %s138 = scalar_lea.vmem [#allocation3], %s137
          %s139 = smul.u32 2, %s20
          %s141 = ssub.s32 512, 512
          %142 = vsyncadd %s135, %s141
          %s143 = smul.addr %s19, 4
          %s144 = sadd.s32 %s139, %s143
          %s145 = smul.addr %s144, 128
          %s146 = scalar_lea.hbm %s0, %s145
          %s147 = sshll.u32 %s138, 4
          %s148 = int_to_ptr.vmem [resolvable:$true] %s147
          %153 = dma.hbm_to_vmem [thread:$0]  %s146, 512, %s148, %s135, 256, 256, 16
        $region24: #{tpu_custom_call.1} parent=19 // pred_fallthru
          _
      $region20: #{tpu_custom_call.1} parent=5 // pred_fallthru
        _
      %p154 = scmp.le.s32.totalorder 1, %s12
      %p155 = scmp.lt.s32.totalorder %s12, 3
      %p156 = pnand %p154, %p155
      %p157 = pneg %p156
      // Predicated region
      $region25: #{tpu_custom_call.1} parent=5 // pred_check
        _
      $region26: #{tpu_custom_call.1} parent=5 // pred_check_branch
        %159 = sbr.rel (%p156) target = $region28
      $region27: #{tpu_custom_call.1} parent=5 // pred_region
        %s160 = ssub.s32 %s12, 1
        %s161 = sand.u32 %s39, 1
        %s162 = scalar_lea.sflag [#allocation4], %s161
        %s163 = sand.u32 %s39, 1
        %s164 = smul.addr %s163, 32
        %s165 = scalar_lea.vmem [#allocation3], %s164
        // Predicated region
        $region29: #{tpu_custom_call.1} parent=27 // pred_check
          %p166 = pneg %p52
        $region30: #{tpu_custom_call.1} parent=27 // pred_check_branch
          %168 = sbr.rel (%p166) target = $region32
        $region31: #{tpu_custom_call.1} parent=27 // pred_region
          %169 = dma.done %s162, 512
        $region32: #{tpu_custom_call.1} parent=27 // pred_fallthru
          _
        // Predicated region
        $region33: #{tpu_custom_call.1} parent=27 // pred_check
          %p170 = pneg %p73
        $region34: #{tpu_custom_call.1} parent=27 // pred_check_branch
          %172 = sbr.rel (%p170) target = $region36
        $region35: #{tpu_custom_call.1} parent=27 // pred_region
          %173 = dma.done [#allocation6], 256
        $region36: #{tpu_custom_call.1} parent=27 // pred_fallthru
          _
        %s174 = sand.u32 %s39, 1
        %s175 = scalar_lea.sflag [#allocation4], %s174
        %s176 = sand.u32 %s39, 1
        %s177 = smul.addr %s176, 32
        %s178 = scalar_lea.vmem [#allocation3], %s177
        %p179 = pneg %p52
        %p180 = pneg %p49
        %p181 = pneg %p73
        %p182 = pneg %p70
        %p183 = pneg %p99
        %p184 = pneg %p96
        %p185 = scmp.lt.s32.totalorder %s21, 1
        %s186 = scalar_select %p185, %s21, 1
        %s187 = smul.addr %s186, 2
        %s188 = smul.addr %s187, 8
        %s189 = scalar_lea.vmem %s2, %s188
        %s190 = smul.u32 2, %s22
        %p191 = scmp.lt.s32.totalorder %s21, 1
        %s192 = scalar_select %p191, %s21, 1
        %s193 = smul.addr %s192, 2
        %s194 = smul.addr %s193, 8
        %s195 = scalar_lea.vmem %s2, %s194
        %p196 = scmp.eq.s32.totalorder %s22, 0
        // Predicated region
        $region37: #{tpu_custom_call.1} parent=27 // pred_check
          %p197 = pneg %p196
        $region38: #{tpu_custom_call.1} parent=27 // pred_check_branch
          %199 = sbr.rel (%p197) target = $region40
        $region39: #{tpu_custom_call.1} parent=27 // pred_region
          %vm200 = vcmask 7168
          %201 = vst.msk [vmem:[#allocation2] sm:$0xff] %vm200, 0.0
          %202 = vst.msk [vmem:[#allocation2 + $0x8] sm:$0xff] %vm200, 0.0
        $region40: #{tpu_custom_call.1} parent=27 // pred_fallthru
          _
        %v203 = vld [vmem:[%s165] sm:$0xff]
        %v204 = vld [vmem:[%s165 + $0x8] sm:$0xff]
        %v205 = vld [vmem:[%s165 + $0x10] sm:$0xff]
        %v206 = vld [vmem:[%s165 + $0x18] sm:$0xff]
        %v207 = vld [vmem:[#allocation2] sm:$0xff]
        %v208 = vld [vmem:[#allocation2 + $0x8] sm:$0xff]
        %v209 = vadd.f32 %v203, %v204
        %210 = vadd.xlane.f32.xlu0 %v209
        %v211 = vpop.xlane.xlu0 %210
        %v212 = vadd.f32 %v205, %v206
        %213 = vadd.xlane.f32.xlu0 %v212
        %v214 = vpop.xlane.xlu0 %213
        %v215 = vadd.f32 %v207, %v211
        %v216 = vadd.f32 %v208, %v214
        %vm217 = vcmask 7168
        %218 = vst.msk [vmem:[#allocation2] sm:$0xff] %vm217, %v215
        %219 = vst.msk [vmem:[#allocation2 + $0x8] sm:$0xff] %vm217, %v216
        // Predicated region
        $region41: #{tpu_custom_call.1} parent=27 // pred_check
          %p220 = pneg %p196
        $region42: #{tpu_custom_call.1} parent=27 // pred_check_branch
          %222 = sbr.rel (%p220) target = $region44
        $region43: #{tpu_custom_call.1} parent=27 // pred_region
          %v223 = vld [vmem:[#allocation2] sm:$0xff]
          %v224 = vld [vmem:[#allocation2 + $0x8] sm:$0xff]
          %v225 = vmul.f32 %v223, 0.00390625
          %v226 = vmul.f32 %v224, 0.00390625
          %v227 = vld [vmem:[#allocation5] sm:$0xff]
          %v228 = vld [vmem:[#allocation5 + $0x8] sm:$0xff]
          %vm229 = vcmask 130048
          %v231 = vsel %vm229, %v227, 0
          %v234 = vsel %vm229, %v228, 0
          %236 = vmatprep.subr.mxu0 0.0
          %237 = vmatpush1.msra.mxu0 %v225
          %238 = vmatprep.subr.mxu0 0.0
          %239 = vmatpush1.msra.mxu0 %v226
          %240 = vmatprep.subr.mxu0 0.0
          %241 = vmatpush1.msra.mxu0 0.0
          %242 = vmatprep.subr.mxu0 0.0
          %243 = vmatpush1.msra.mxu0 0.0
          %244 = vmatprep.subr.mxu0 0.0
          %245 = vmatpush1.msra.mxu0 0.0
          %246 = vmatprep.subr.mxu0 0.0
          %247 = vmatpush1.msra.mxu0 0.0
          %248 = vmatprep.subr.mxu0 0.0
          %249 = vmatpush1.msra.mxu0 0.0
          %250 = vmatprep.subr.mxu0 0.0
          %251 = vmatpush1.msra.mxu0 0.0
          %252 = vmatprep.subr.mxu0 0.0
          %253 = vmatpush1.msra.mxu0 0.0
          %254 = vmatprep.subr.mxu0 0.0
          %255 = vmatpush1.msra.mxu0 0.0
          %256 = vmatprep.subr.mxu0 0.0
          %257 = vmatpush1.msra.mxu0 0.0
          %258 = vmatprep.subr.mxu0 0.0
          %259 = vmatpush1.msra.mxu0 0.0
          %260 = vmatprep.subr.mxu0 0.0
          %261 = vmatpush1.msra.mxu0 0.0
          %262 = vmatprep.subr.mxu0 0.0
          %263 = vmatpush1.msra.mxu0 0.0
          %264 = vmatprep.subr.mxu0 0.0
          %265 = vmatpush1.msra.mxu0 0.0
          %266 = vmatprep.subr.mxu0 0.0
          %267 = vmatpush1.msra.mxu0 0.0
          %268 = vmatprep.subr.mxu0 0.0
          %269 = vmatpush1.msra.mxu0 0.0
          %270 = vmatprep.subr.mxu0 0.0
          %271 = vmatpush1.msra.mxu0 0.0
          %272 = vmatprep.subr.mxu0 0.0
          %273 = vmatpush1.msra.mxu0 0.0
          %274 = vmatprep.subr.mxu0 0.0
          %275 = vmatpush1.msra.mxu0 0.0
          %276 = vmatprep.subr.mxu0 0.0
          %277 = vmatpush1.msra.mxu0 0.0
          %278 = vmatprep.subr.mxu0 0.0
          %279 = vmatpush1.msra.mxu0 0.0
          %280 = vmatprep.subr.mxu0 0.0
          %281 = vmatpush1.msra.mxu0 0.0
          %282 = vmatprep.subr.mxu0 0.0
          %283 = vmatpush1.msra.mxu0 0.0
          %284 = vmatprep.subr.mxu0 0.0
          %285 = vmatpush1.msra.mxu0 0.0
          %286 = vmatprep.subr.mxu0 0.0
          %287 = vmatpush1.msra.mxu0 0.0
          %288 = vmatprep.subr.mxu0 0.0
          %289 = vmatpush1.msra.mxu0 0.0
          %290 = vmatprep.subr.mxu0 0.0
          %291 = vmatpush1.msra.mxu0 0.0
          %292 = vmatprep.subr.mxu0 0.0
          %293 = vmatpush1.msra.mxu0 0.0
          %294 = vmatprep.subr.mxu0 0.0
          %295 = vmatpush1.msra.mxu0 0.0
          %296 = vmatprep.subr.mxu0 0.0
          %297 = vmatpush1.msra.mxu0 0.0
          %298 = vmatprep.subr.mxu0 0.0
          %299 = vmatpush1.msra.mxu0 0.0
          %300 = vmatprep.mubr.f32.mxu0 0.0
          %301 = vmatmul.mubr.f32.gmra.mrb[0].mxu0 %v231
          %v302 = vpop.f32.mrb[0].mxu0
          %v303 = vadd.f32 0.0, %v302
          %v304 = vpop.f32.mrb[0].mxu0
          %305 = vmatprep.mubr.f32.mxu0 0.0
          %306 = vmatmul.mubr.f32.gmra.mrb[0].mxu0 %v234
          %v307 = vpop.f32.mrb[0].mxu0
          %v308 = vadd.f32 0.0, %v307
          %v309 = vpop.f32.mrb[0].mxu0
          %310 = vdwg.mxu0
          %v311 = vxor.u32 %v303, 2147483648
          %v312 = vxor.u32 %v308, 2147483648
          %v313 = vmul.f32 %v311, 1.442695
          %v314 = vpow.pop %v313
          %v315 = vmul.f32 %v312, 1.442695
          %v316 = vpow.pop %v315
          %v317 = vadd.f32 %v314, 1.0
          %v318 = vadd.f32 %v316, 1.0
          %v319 = vrcp.pop %v317
          %v320 = vmul.f32 1.0, %v319
          %v321 = vrcp.pop %v318
          %v322 = vmul.f32 1.0, %v321
          %323 = vst.msk [vmem:[%s195] sm:$0xff] %vm217, %v320
          %324 = vst.msk [vmem:[%s195 + $0x8] sm:$0xff] %vm217, %v322
        $region44: #{tpu_custom_call.1} parent=27 // pred_fallthru
          _
        %p325 = scmp.lt.s32.totalorder %s21, 1
        %s326 = scalar_select %p325, %s21, 1
        %s327 = smul.addr %s326, 2
        %s328 = smul.addr %s327, 8
        %s329 = scalar_lea.vmem %s2, %s328
        // Predicated region
        $region45: #{tpu_custom_call.1} parent=27 // pred_check
          %p330 = pneg %p96
        $region46: #{tpu_custom_call.1} parent=27 // pred_check_branch
          %332 = sbr.rel (%p330) target = $region48
        $region47: #{tpu_custom_call.1} parent=27 // pred_region
          _
        $region48: #{tpu_custom_call.1} parent=27 // pred_fallthru
          _
      $region28: #{tpu_custom_call.1} parent=5 // pred_fallthru
        _
      %p333 = scmp.le.s32.totalorder 2, %s12
      // Predicated region
      $region49: #{tpu_custom_call.1} parent=5 // pred_check
        %p334 = pneg %p333
      $region50: #{tpu_custom_call.1} parent=5 // pred_check_branch
        %336 = sbr.rel (%p334) target = $region52
      $region51: #{tpu_custom_call.1} parent=5 // pred_region
        %s337 = ssub.s32 %s12, 2
        // Predicated region
        $region53: #{tpu_custom_call.1} parent=51 // pred_check
          %p338 = pneg %p102
        $region54: #{tpu_custom_call.1} parent=51 // pred_check_branch
          %340 = sbr.rel (%p338) target = $region56
        $region55: #{tpu_custom_call.1} parent=51 // pred_region
          %p341 = scmp.lt.s32.totalorder %s23, 1
          %s342 = scalar_select %p341, %s23, 1
          %s343 = smul.addr %s342, 2
          %s344 = smul.addr %s343, 8
          %s345 = scalar_lea.vmem %s2, %s344
        $region56: #{tpu_custom_call.1} parent=51 // pred_fallthru
          _
      $region52: #{tpu_custom_call.1} parent=5 // pred_fallthru
        _
    $region6: #{tpu_custom_call.1} parent=1 // loop_footer
      %s16 = sadd.s32 1, %s12
    $region7: #{tpu_custom_call.1} parent=1 // loop_footer_branch
      %11 = sbr.rel target = $region3
    $region8: #{tpu_custom_call.1} parent=1 // loop_exit
      _
    %346 = vsyncpa [#allocation4], 1
    %s347 = scalar_lea.sflag [#allocation4], 1
    %348 = vsyncpa %s347, 1
    %349 = vsyncpa [#allocation6], 1

</llo_original>
